<compile_context>
chip_gen: v7x
topology: tpu7x:2x2x1
jax: 0.10.0
libtpu: 0.0.40
codegen_flags: <defaults>
</compile_context>

<pallas_src>
import jax
import jax.numpy as jnp
from jax.experimental import pallas as pl
from jax.experimental.pallas import tpu as pltpu


def _emg_mlp_kernel(x_ref, w1_ref, b1_ref, w2_ref, b2_ref, out_ref):
    # Cast to the MXU compute dtype AFTER the VMEM load: x streams from HBM once,
    # in its native dtype; the cast is a VPU op hidden under the MXU.
    x = x_ref[...].astype(w1_ref.dtype)
    # fc1 on the MXU, f32 accumulation.
    h = jnp.dot(x, w1_ref[...], preferred_element_type=jnp.float32)
    # Bias + ReLU in f32 on the VPU (safe on v5e, which has no bf16 VPU).
    h = jnp.maximum(h + b1_ref[...], 0.0)
    # Dropout(p=0.5) is identity at inference time.
    # fc2 on the MXU (hidden cast back to the weight compute dtype; no-op for f32).
    out = jnp.dot(h.astype(w2_ref.dtype), w2_ref[...],
                  preferred_element_type=jnp.float32)
    out_ref[...] = (out + b2_ref[...]).astype(out_ref.dtype)


def _round_up(n, m):
    return ((n + m - 1) // m) * m


def _choose_tile_b(tile_b, d_in, c_pad, x_itemsize, out_itemsize, weight_bytes,
                   budget_bytes=12 << 20):
    """Clamp tile_b so double-buffered x/out tiles + resident weights fit a
    conservative VMEM budget (safe under the 16 MiB v5e default scoped limit)."""
    per_row = 2 * (d_in * x_itemsize + c_pad * out_itemsize)   # double-buffered
    avail = max(budget_bytes - weight_bytes, per_row * 16)
    cap = max(16, (avail // per_row) // 16 * 16)               # multiple of 16 (bf16 sublanes)
    t = min(int(tile_b), int(cap))
    return max(16, (t // 16) * 16)


def emg_classifier_forward(x, w1, b1, w2, b2, *,
                           compute_dtype=jnp.bfloat16, tile_b=2048):
    """EMGClassifier forward.

    x : (B, D_in) activations
    w1: (D_in, H)  fc1 weight (pre-transposed from PyTorch (H, D_in)), b1: (H,)
    w2: (H, C)     fc2 weight (pre-transposed from PyTorch (C, H)),   b2: (C,)
    Returns (logits (B, C) float32, {'features': x}) -- 'features' is the raw
    input, matching the PyTorch module (f = x is captured before fc1).
    """
    B, D_in = x.shape
    if w1.shape[0] != D_in:
        raise ValueError("w1 must be (D_in, H); transpose the PyTorch nn.Linear weight")
    H = w1.shape[1]
    if w2.shape[0] != H:
        raise ValueError("w2 must be (H, C); transpose the PyTorch nn.Linear weight")
    C = w2.shape[1]

    compute_dtype = jnp.dtype(compute_dtype)
    # Lane-dense output: pad classifier dim to a multiple of 128 (cheap one-off pads
    # on small weight/bias tensors only; x is never padded or pre-cast).
    C_pad = _round_up(C, 128)
    w2_p = w2 if C_pad == C else jnp.pad(w2, ((0, 0), (0, C_pad - C)))
    b2_p = b2 if C_pad == C else jnp.pad(b2, (0, C_pad - C))

    w1_c = w1.astype(compute_dtype)
    w2_c = w2_p.astype(compute_dtype)
    b1_2d = b1.reshape(1, H).astype(jnp.float32)
    b2_2d = b2_p.reshape(1, C_pad).astype(jnp.float32)

    # Emit padded logits in the compute dtype (halves writeback bytes for bf16);
    # the wrapper upcasts only the real (B, C) block after slicing.
    out_dtype = jnp.float32 if compute_dtype == jnp.dtype(jnp.float32) else compute_dtype

    # Advisory cost estimate so XLA can schedule/overlap this custom call.
    x_bytes = x.size * x.dtype.itemsize
    weight_bytes = (w1_c.size + w2_c.size) * compute_dtype.itemsize
    out_bytes = B * C_pad * jnp.dtype(out_dtype).itemsize
    cost = pl.CostEstimate(
        flops=2 * B * (D_in * H + H * C_pad),
        transcendentals=0,
        bytes_accessed=x_bytes + weight_bytes + out_bytes
                       + (b1_2d.size + b2_2d.size) * 4)

    out_shape = jax.ShapeDtypeStruct((B, C_pad), out_dtype)

    if B <= 256:
        # Whole problem fits comfortably in VMEM: no grid, no pipeline bookkeeping.
        vmem_spec = pl.BlockSpec(memory_space=pltpu.MemorySpace.VMEM)
        logits_p = pl.pallas_call(
            _emg_mlp_kernel,
            out_shape=out_shape,
            in_specs=[vmem_spec] * 5,
            out_specs=vmem_spec,
            cost_estimate=cost,
        )(x, w1_c, b1_2d, w2_c, b2_2d)
    else:
        # Batch-tiled grid with a partial last tile: x/out tiles stream,
        # weights & biases stay VMEM-resident across grid steps.
        tb = _choose_tile_b(tile_b, D_in, C_pad, x.dtype.itemsize,
                            jnp.dtype(out_dtype).itemsize, weight_bytes)
        grid = (pl.cdiv(B, tb),)
        logits_p = pl.pallas_call(
            _emg_mlp_kernel,
            out_shape=out_shape,
            grid=grid,
            in_specs=[
                pl.BlockSpec((tb, D_in), lambda i: (i, 0)),
                pl.BlockSpec((D_in, H), lambda i: (0, 0)),
                pl.BlockSpec((1, H), lambda i: (0, 0)),
                pl.BlockSpec((H, C_pad), lambda i: (0, 0)),
                pl.BlockSpec((1, C_pad), lambda i: (0, 0)),
            ],
            out_specs=pl.BlockSpec((tb, C_pad), lambda i: (i, 0)),
            compiler_params=pltpu.CompilerParams(
                dimension_semantics=("parallel",),
            ),
            cost_estimate=cost,
        )(x, w1_c, b1_2d, w2_c, b2_2d)

    logits = logits_p[:, :C].astype(jnp.float32)
    return logits, {"features": x}


def _ref_forward(x, w1, b1, w2, b2, compute_dtype=jnp.float32):
    """Pure-JAX reference with dtype-matched matmul inputs (f32 accumulation)."""
    cd = compute_dtype
    h = jnp.dot(x.astype(cd), w1.astype(cd), preferred_element_type=jnp.float32) + b1
    h = jnp.maximum(h, 0.0)
    return jnp.dot(h.astype(cd), w2.astype(cd), preferred_element_type=jnp.float32) + b2


if __name__ == "__main__":
    # Small shapes consistent with the module: hidden=256, num_classes=11,
    # small input_size / batch for the test.
    B, D_IN, HID, NCLS = 8, 256, 256, 11

    key = jax.random.PRNGKey(0)
    kx, k1, k2, k3, k4, kx2 = jax.random.split(key, 6)

    x = jax.random.normal(kx, (B, D_IN), dtype=jnp.float32)
    # PyTorch-style uniform fan-in init (weights already transposed to (in, out)).
    bound1 = 1.0 / (D_IN ** 0.5)
    w1 = jax.random.uniform(k1, (D_IN, HID), jnp.float32, -bound1, bound1)
    b1 = jax.random.uniform(k2, (HID,), jnp.float32, -bound1, bound1)
    bound2 = 1.0 / (HID ** 0.5)
    w2 = jax.random.uniform(k3, (HID, NCLS), jnp.float32, -bound2, bound2)
    b2 = jax.random.uniform(k4, (NCLS,), jnp.float32, -bound2, bound2)

    # Path A: small batch, exact f32 path (un-gridded, fully VMEM-resident).
    logits, aux = emg_classifier_forward(x, w1, b1, w2, b2,
                                         compute_dtype=jnp.float32)
    jax.block_until_ready(logits)
    ref_small = _ref_forward(x, w1, b1, w2, b2)
    assert logits.shape == (B, NCLS)
    assert jnp.allclose(logits, ref_small, atol=2e-4, rtol=2e-4)
    assert jnp.array_equal(aux["features"], x)

    # Path B: larger batch, f32 path with a multi-step grid and a partial last
    # tile (300 rows, tile_b=128 -> 3 steps, last step 44 real rows).
    B2 = 300
    x2 = jax.random.normal(kx2, (B2, D_IN), dtype=jnp.float32)
    ref_big_f32 = _ref_forward(x2, w1, b1, w2, b2)
    logits2, aux2 = emg_classifier_forward(x2, w1, b1, w2, b2,
                                           compute_dtype=jnp.float32, tile_b=128)
    jax.block_until_ready(logits2)
    assert logits2.shape == (B2, NCLS)
    assert jnp.allclose(logits2, ref_big_f32, atol=2e-4, rtol=2e-4)
    assert jnp.array_equal(aux2["features"], x2)

    # Path C: default bf16 MXU-input path (dtype-aware tolerance vs a bf16-input
    # reference; remaining delta is only the final bf16 logits rounding).
    ref_big_bf16 = _ref_forward(x2, w1, b1, w2, b2, compute_dtype=jnp.bfloat16)
    logits3, aux3 = emg_classifier_forward(x2, w1, b1, w2, b2, tile_b=128)
    jax.block_until_ready(logits3)
    assert logits3.shape == (B2, NCLS)
    assert jnp.allclose(logits3, ref_big_bf16, atol=1e-2, rtol=1e-2)
    assert jnp.array_equal(aux3["features"], x2)

    print("KERNEL_OK")
</pallas_src>

<mosaic_0001>
module attributes {stable_mosaic.version = 11 : i64} {
  func.func @_emg_mlp_kernel(%arg0: memref<8x256xf32, #tpu.memory_space<vmem>>, %arg1: memref<256x256xf32, #tpu.memory_space<vmem>>, %arg2: memref<1x256xf32, #tpu.memory_space<vmem>>, %arg3: memref<256x128xf32, #tpu.memory_space<vmem>>, %arg4: memref<1x128xf32, #tpu.memory_space<vmem>>, %arg5: memref<8x128xf32, #tpu.memory_space<vmem>>) attributes {dimension_semantics = [], scalar_prefetch = 0 : i64, scratch_operands = 0 : i64, tpu.core_type = #tpu.core_type<tc>} {
    %c0 = arith.constant 0 : index
    %c0_0 = arith.constant 0 : index
    %0 = vector.load %arg0[%c0, %c0_0] : memref<8x256xf32, #tpu.memory_space<vmem>>, vector<8x256xf32>
    %c0_1 = arith.constant 0 : index
    %c0_2 = arith.constant 0 : index
    %1 = vector.load %arg1[%c0_1, %c0_2] : memref<256x256xf32, #tpu.memory_space<vmem>>, vector<256x256xf32>
    %cst = arith.constant dense<0.000000e+00> : vector<8x256xf32>
    %2 = tpu.matmul %0, %1, %cst {dimension_numbers = #tpu.dot_dimension_numbers<[1], [0], [0], [1], [0, 0, 1, 1], [], []>} : vector<8x256xf32>, vector<256x256xf32>, vector<8x256xf32> -> vector<8x256xf32>
    %c0_3 = arith.constant 0 : index
    %c0_4 = arith.constant 0 : index
    %3 = vector.load %arg2[%c0_3, %c0_4] : memref<1x256xf32, #tpu.memory_space<vmem>>, vector<1x256xf32>
    %4 = vector.broadcast %3 : vector<1x256xf32> to vector<8x256xf32>
    %5 = arith.addf %2, %4 : vector<8x256xf32>
    %cst_5 = arith.constant 0.000000e+00 : f32
    %6 = vector.broadcast %cst_5 : f32 to vector<8x256xf32>
    %7 = arith.maximumf %5, %6 : vector<8x256xf32>
    %c0_6 = arith.constant 0 : index
    %c0_7 = arith.constant 0 : index
    %8 = vector.load %arg3[%c0_6, %c0_7] : memref<256x128xf32, #tpu.memory_space<vmem>>, vector<256x128xf32>
    %cst_8 = arith.constant dense<0.000000e+00> : vector<8x128xf32>
    %9 = tpu.matmul %7, %8, %cst_8 {dimension_numbers = #tpu.dot_dimension_numbers<[1], [0], [0], [1], [0, 0, 1, 1], [], []>} : vector<8x256xf32>, vector<256x128xf32>, vector<8x128xf32> -> vector<8x128xf32>
    %c0_9 = arith.constant 0 : index
    %c0_10 = arith.constant 0 : index
    %10 = vector.load %arg4[%c0_9, %c0_10] : memref<1x128xf32, #tpu.memory_space<vmem>>, vector<1x128xf32>
    %11 = vector.broadcast %10 : vector<1x128xf32> to vector<8x128xf32>
    %12 = arith.addf %9, %11 : vector<8x128xf32>
    %c0_11 = arith.constant 0 : index
    %c0_12 = arith.constant 0 : index
    %13 = vector.load %arg5[%c0_11, %c0_12] : memref<8x128xf32, #tpu.memory_space<vmem>>, vector<8x128xf32>
    tpu.vector_store %arg5[%c0_11, %c0_12], %12 {strides = array<i32>} : memref<8x128xf32, #tpu.memory_space<vmem>>, vector<8x128xf32>,
    return
  }
}

</mosaic_0001>

<llo_original>
// kernel: tpu_custom_call.1
$region0: #{tpu_custom_call.1}
  #allocation0 [shape = 'u32[]', space=smem, size = 0x4, offset = 0x4, fixed_abs, tag = 'smem constant byte address 0x4 - core index']
  #allocation1 [shape = 'u32[144,128]{1,0:T(1,128)}', space=vmem, size = 0x12000, scoped, tag = 'internal scratch']
  %s0 = inlined_call_operand.hbm [shape: f32[8,256], index: 0, kind: input, shape index: {}]
  %s1 = inlined_call_operand.hbm [shape: f32[256,256], index: 1, kind: input, shape index: {}]
  %s2 = inlined_call_operand.vmem [shape: f32[1,256], index: 2, kind: input, shape index: {}]
  %s3 = inlined_call_operand.hbm [shape: f32[256,128], index: 3, kind: input, shape index: {}]
  %s4 = inlined_call_operand.vmem [shape: f32[1,128], index: 4, kind: input, shape index: {}]
  %s5 = inlined_call_operand.hbm [shape: f32[8,128], index: 5, kind: output, shape index: {}]
  %s6 = sld [smem:[#allocation0]]
  $region42: #{tpu_custom_call.1} parent=0
    _
  %s8 = ssub.s32 1, %s6
  %s9 = scalar_select 0, %s8, %s6
  $region1: #{tpu_custom_call.1} parent=0
    #allocation2 [shape = 'u8[8192]{0}', space=vmem, size = 0x2000, scoped, tag = 'input window, operand 0, single buffered']
    #allocation3 [shape = 's32[1]{0}', space=sflag, size = 0x4, scoped, tag = 'scoped memory for tpu_custom_call.1']
    #allocation4 [shape = 's32[1]{0}', space=sflag, size = 0x4, scoped, tag = 'scoped memory for tpu_custom_call.1']
    #allocation5 [shape = 'u8[262144]{0}', space=vmem, size = 0x40000, scoped, tag = 'input window, operand 1, single buffered']
    #allocation6 [shape = 's32[1]{0}', space=sflag, size = 0x4, scoped, tag = 'scoped memory for tpu_custom_call.1']
    #allocation7 [shape = 'u8[131072]{0}', space=vmem, size = 0x20000, scoped, tag = 'input window, operand 3, single buffered']
    #allocation8 [shape = 'u8[4096]{0}', space=vmem, size = 0x1000, scoped, tag = 'output window, operand 0, single buffered']
    %10 = vsyncpa [#allocation3], 0
    %11 = vsyncpa [#allocation6], 0
    %12 = vsyncpa [#allocation4], 0
    // Predicated region
    $region2: #{tpu_custom_call.1} parent=1 // pred_check
      _
    $region3: #{tpu_custom_call.1} parent=1 // pred_check_branch
      %14 = sbr.rel (0) target = $region5
    $region4: #{tpu_custom_call.1} parent=1 // pred_region
      %s16 = ssub.s32 256, 256
      %17 = vsyncadd [#allocation3], %s16
      %s19 = sshll.u32 [#allocation2], 4
      %s20 = int_to_ptr.vmem [resolvable:$true] %s19
      %22 = dma.hbm_to_vmem [thread:$0]  %s0, 256, %s20, [#allocation3]
    $region5: #{tpu_custom_call.1} parent=1 // pred_fallthru
      _
    // Predicated region
    $region6: #{tpu_custom_call.1} parent=1 // pred_check
      _
    $region7: #{tpu_custom_call.1} parent=1 // pred_check_branch
      %24 = sbr.rel (0) target = $region9
    $region8: #{tpu_custom_call.1} parent=1 // pred_region
      %s26 = ssub.s32 8192, 8192
      %27 = vsyncadd [#allocation6], %s26
      %s28 = sshll.u32 [#allocation5], 4
      %s29 = int_to_ptr.vmem [resolvable:$true] %s28
      %34 = dma.hbm_to_vmem [thread:$0]  %s1, 8192, %s29, [#allocation6], 256, 256, 16
    $region9: #{tpu_custom_call.1} parent=1 // pred_fallthru
      _
    // Predicated region
    $region10: #{tpu_custom_call.1} parent=1 // pred_check
      _
    $region11: #{tpu_custom_call.1} parent=1 // pred_check_branch
      %36 = sbr.rel (0) target = $region13
    $region12: #{tpu_custom_call.1} parent=1 // pred_region
      _
    $region13: #{tpu_custom_call.1} parent=1 // pred_fallthru
      _
    // Predicated region
    $region14: #{tpu_custom_call.1} parent=1 // pred_check
      _
    $region15: #{tpu_custom_call.1} parent=1 // pred_check_branch
      %38 = sbr.rel (0) target = $region17
    $region16: #{tpu_custom_call.1} parent=1 // pred_region
      %s40 = ssub.s32 4096, 4096
      %41 = vsyncadd [#allocation6], %s40
      %s42 = sshll.u32 [#allocation7], 4
      %s43 = int_to_ptr.vmem [resolvable:$true] %s42
      %48 = dma.hbm_to_vmem [thread:$0]  %s3, 4096, %s43, [#allocation6], 128, 128, 8
    $region17: #{tpu_custom_call.1} parent=1 // pred_fallthru
      _
    // Predicated region
    $region18: #{tpu_custom_call.1} parent=1 // pred_check
      _
    $region19: #{tpu_custom_call.1} parent=1 // pred_check_branch
      %50 = sbr.rel (0) target = $region21
    $region20: #{tpu_custom_call.1} parent=1 // pred_region
      _
    $region21: #{tpu_custom_call.1} parent=1 // pred_fallthru
      _
    // Predicated region
    $region22: #{tpu_custom_call.1} parent=1 // pred_check
      _
    $region23: #{tpu_custom_call.1} parent=1 // pred_check_branch
      %52 = sbr.rel (0) target = $region25
    $region24: #{tpu_custom_call.1} parent=1 // pred_region
      %53 = dma.done [#allocation3], 256
    $region25: #{tpu_custom_call.1} parent=1 // pred_fallthru
      _
    // Predicated region
    $region26: #{tpu_custom_call.1} parent=1 // pred_check
      _
    $region27: #{tpu_custom_call.1} parent=1 // pred_check_branch
      %55 = sbr.rel (0) target = $region29
    $region28: #{tpu_custom_call.1} parent=1 // pred_region
      %56 = dma.done [#allocation6], 8192
    $region29: #{tpu_custom_call.1} parent=1 // pred_fallthru
      _
    // Predicated region
    $region30: #{tpu_custom_call.1} parent=1 // pred_check
      _
    $region31: #{tpu_custom_call.1} parent=1 // pred_check_branch
      %58 = sbr.rel (0) target = $region33
    $region32: #{tpu_custom_call.1} parent=1 // pred_region
      %59 = dma.done [#allocation6], 4096
    $region33: #{tpu_custom_call.1} parent=1 // pred_fallthru
      _
    %v60 = vld [vmem:[#allocation2] sm:$0xff]
    %v61 = vld [vmem:[#allocation2 + $0x8] sm:$0xff]
    %v62 = vld [vmem:[#allocation5] sm:$0xff]
    %v63 = vld [vmem:[#allocation5 + $0x8] sm:$0xff]
    %v64 = vld [vmem:[#allocation5 + $0x10] sm:$0xff]
    %v65 = vld [vmem:[#allocation5 + $0x18] sm:$0xff]
    %v66 = vld [vmem:[#allocation5 + $0x20] sm:$0xff]
    %v67 = vld [vmem:[#allocation5 + $0x28] sm:$0xff]
    %v68 = vld [vmem:[#allocation5 + $0x30] sm:$0xff]
    %v69 = vld [vmem:[#allocation5 + $0x38] sm:$0xff]
    %v70 = vld [vmem:[#allocation5 + $0x40] sm:$0xff]
    %v71 = vld [vmem:[#allocation5 + $0x48] sm:$0xff]
    %v72 = vld [vmem:[#allocation5 + $0x50] sm:$0xff]
    %v73 = vld [vmem:[#allocation5 + $0x58] sm:$0xff]
    %v74 = vld [vmem:[#allocation5 + $0x60] sm:$0xff]
    %v75 = vld [vmem:[#allocation5 + $0x68] sm:$0xff]
    %v76 = vld [vmem:[#allocation5 + $0x70] sm:$0xff]
    %v77 = vld [vmem:[#allocation5 + $0x78] sm:$0xff]
    %v78 = vld [vmem:[#allocation5 + $0x80] sm:$0xff]
    %v79 = vld [vmem:[#allocation5 + $0x88] sm:$0xff]
    %v80 = vld [vmem:[#allocation5 + $0x90] sm:$0xff]
    %v81 = vld [vmem:[#allocation5 + $0x98] sm:$0xff]
    %v82 = vld [vmem:[#allocation5 + $0xa0] sm:$0xff]
    %v83 = vld [vmem:[#allocation5 + $0xa8] sm:$0xff]
    %v84 = vld [vmem:[#allocation5 + $0xb0] sm:$0xff]
    %v85 = vld [vmem:[#allocation5 + $0xb8] sm:$0xff]
    %v86 = vld [vmem:[#allocation5 + $0xc0] sm:$0xff]
    %v87 = vld [vmem:[#allocation5 + $0xc8] sm:$0xff]
    %v88 = vld [vmem:[#allocation5 + $0xd0] sm:$0xff]
    %v89 = vld [vmem:[#allocation5 + $0xd8] sm:$0xff]
    %v90 = vld [vmem:[#allocation5 + $0xe0] sm:$0xff]
    %v91 = vld [vmem:[#allocation5 + $0xe8] sm:$0xff]
    %v92 = vld [vmem:[#allocation5 + $0xf0] sm:$0xff]
    %v93 = vld [vmem:[#allocation5 + $0xf8] sm:$0xff]
    %v94 = vld [vmem:[#allocation5 + $0x100] sm:$0xff]
    %v95 = vld [vmem:[#allocation5 + $0x108] sm:$0xff]
    %v96 = vld [vmem:[#allocation5 + $0x110] sm:$0xff]
    %v97 = vld [vmem:[#allocation5 + $0x118] sm:$0xff]
    %v98 = vld [vmem:[#allocation5 + $0x120] sm:$0xff]
    %v99 = vld [vmem:[#allocation5 + $0x128] sm:$0xff]
    %v100 = vld [vmem:[#allocation5 + $0x130] sm:$0xff]
    %v101 = vld [vmem:[#allocation5 + $0x138] sm:$0xff]
    %v102 = vld [vmem:[#allocation5 + $0x140] sm:$0xff]
    %v103 = vld [vmem:[#allocation5 + $0x148] sm:$0xff]
    %v104 = vld [vmem:[#allocation5 + $0x150] sm:$0xff]
    %v105 = vld [vmem:[#allocation5 + $0x158] sm:$0xff]
    %v106 = vld [vmem:[#allocation5 + $0x160] sm:$0xff]
    %v107 = vld [vmem:[#allocation5 + $0x168] sm:$0xff]
    %v108 = vld [vmem:[#allocation5 + $0x170] sm:$0xff]
    %v109 = vld [vmem:[#allocation5 + $0x178] sm:$0xff]
    %v110 = vld [vmem:[#allocation5 + $0x180] sm:$0xff]
    %v111 = vld [vmem:[#allocation5 + $0x188] sm:$0xff]
    %v112 = vld [vmem:[#allocation5 + $0x190] sm:$0xff]
    %v113 = vld [vmem:[#allocation5 + $0x198] sm:$0xff]
    %v114 = vld [vmem:[#allocation5 + $0x1a0] sm:$0xff]
    %v115 = vld [vmem:[#allocation5 + $0x1a8] sm:$0xff]
    %v116 = vld [vmem:[#allocation5 + $0x1b0] sm:$0xff]
    %v117 = vld [vmem:[#allocation5 + $0x1b8] sm:$0xff]
    %v118 = vld [vmem:[#allocation5 + $0x1c0] sm:$0xff]
    %v119 = vld [vmem:[#allocation5 + $0x1c8] sm:$0xff]
    %v120 = vld [vmem:[#allocation5 + $0x1d0] sm:$0xff]
    %v121 = vld [vmem:[#allocation5 + $0x1d8] sm:$0xff]
    %v122 = vld [vmem:[#allocation5 + $0x1e0] sm:$0xff]
    %v123 = vld [vmem:[#allocation5 + $0x1e8] sm:$0xff]
    %v124 = vld [vmem:[#allocation5 + $0x1f0] sm:$0xff]
    %v125 = vld [vmem:[#allocation5 + $0x1f8] sm:$0xff]
    %v126 = vld [vmem:[%s2] sm:$0x3]
    %v128 = vlaneseq
    %v129 = vshrl.u32 %v128, 7
    %v130 = vsub.s32 0, %v129
    %v131 = vrot.slane %v126, %v130
    %v132 = vlaneseq
    %v133 = vshrl.u32 %v132, 7
    %v134 = vsub.s32 1, %v133
    %v135 = vrot.slane %v126, %v134
    %138 = vmatprep.subr.mxu0 %v63
    %139 = vmatpush1.msra.mxu0 %v62
    %140 = vmatprep.subr.mxu0 %v65
    %141 = vmatpush1.msra.mxu0 %v64
    %142 = vmatprep.subr.mxu0 %v67
    %143 = vmatpush1.msra.mxu0 %v66
    %144 = vmatprep.subr.mxu0 %v69
    %145 = vmatpush1.msra.mxu0 %v68
    %146 = vmatprep.subr.mxu0 %v71
    %147 = vmatpush1.msra.mxu0 %v70
    %148 = vmatprep.subr.mxu0 %v73
    %149 = vmatpush1.msra.mxu0 %v72
    %150 = vmatprep.subr.mxu0 %v75
    %151 = vmatpush1.msra.mxu0 %v74
    %152 = vmatprep.subr.mxu0 %v77
    %153 = vmatpush1.msra.mxu0 %v76
    %154 = vmatprep.subr.mxu0 %v79
    %155 = vmatpush1.msra.mxu0 %v78
    %156 = vmatprep.subr.mxu0 %v81
    %157 = vmatpush1.msra.mxu0 %v80
    %158 = vmatprep.subr.mxu0 %v83
    %159 = vmatpush1.msra.mxu0 %v82
    %160 = vmatprep.subr.mxu0 %v85
    %161 = vmatpush1.msra.mxu0 %v84
    %162 = vmatprep.subr.mxu0 %v87
    %163 = vmatpush1.msra.mxu0 %v86
    %164 = vmatprep.subr.mxu0 %v89
    %165 = vmatpush1.msra.mxu0 %v88
    %166 = vmatprep.subr.mxu0 %v91
    %167 = vmatpush1.msra.mxu0 %v90
    %168 = vmatprep.subr.mxu0 %v93
    %169 = vmatpush1.msra.mxu0 %v92
    %170 = vmatprep.subr.mxu0 %v95
    %171 = vmatpush1.msra.mxu0 %v94
    %172 = vmatprep.subr.mxu0 %v97
    %173 = vmatpush1.msra.mxu0 %v96
    %174 = vmatprep.subr.mxu0 %v99
    %175 = vmatpush1.msra.mxu0 %v98
    %176 = vmatprep.subr.mxu0 %v101
    %177 = vmatpush1.msra.mxu0 %v100
    %178 = vmatprep.subr.mxu0 %v103
    %179 = vmatpush1.msra.mxu0 %v102
    %180 = vmatprep.subr.mxu0 %v105
    %181 = vmatpush1.msra.mxu0 %v104
    %182 = vmatprep.subr.mxu0 %v107
    %183 = vmatpush1.msra.mxu0 %v106
    %184 = vmatprep.subr.mxu0 %v109
    %185 = vmatpush1.msra.mxu0 %v108
    %186 = vmatprep.subr.mxu0 %v111
    %187 = vmatpush1.msra.mxu0 %v110
    %188 = vmatprep.subr.mxu0 %v113
    %189 = vmatpush1.msra.mxu0 %v112
    %190 = vmatprep.subr.mxu0 %v115
    %191 = vmatpush1.msra.mxu0 %v114
    %192 = vmatprep.subr.mxu0 %v117
    %193 = vmatpush1.msra.mxu0 %v116
    %194 = vmatprep.subr.mxu0 %v119
    %195 = vmatpush1.msra.mxu0 %v118
    %196 = vmatprep.subr.mxu0 %v121
    %197 = vmatpush1.msra.mxu0 %v120
    %198 = vmatprep.subr.mxu0 %v123
    %199 = vmatpush1.msra.mxu0 %v122
    %200 = vmatprep.subr.mxu0 %v125
    %201 = vmatpush1.msra.mxu0 %v124
    %202 = vmatprep.mubr.f32.mxu0 %v61
    %203 = vmatmul.mubr.f32.gmra.mrb[0].mxu0 %v60
    %v204 = vpop.f32.mrb[0].mxu0
    %v205 = vadd.f32 %v131, %v204
    %v206 = vpop.f32.mrb[0].mxu0
    %v207 = vadd.f32 %v135, %v206
    %208 = vdwg.mxu0
    %v209 = vmax.f32 %v205, 0.0
    %v210 = vmax.f32 %v207, 0.0
    %v211 = vld [vmem:[#allocation7] sm:$0xff]
    %v212 = vld [vmem:[#allocation7 + $0x8] sm:$0xff]
    %v213 = vld [vmem:[#allocation7 + $0x10] sm:$0xff]
    %v214 = vld [vmem:[#allocation7 + $0x18] sm:$0xff]
    %v215 = vld [vmem:[#allocation7 + $0x20] sm:$0xff]
    %v216 = vld [vmem:[#allocation7 + $0x28] sm:$0xff]
    %v217 = vld [vmem:[#allocation7 + $0x30] sm:$0xff]
    %v218 = vld [vmem:[#allocation7 + $0x38] sm:$0xff]
    %v219 = vld [vmem:[#allocation7 + $0x40] sm:$0xff]
    %v220 = vld [vmem:[#allocation7 + $0x48] sm:$0xff]
    %v221 = vld [vmem:[#allocation7 + $0x50] sm:$0xff]
    %v222 = vld [vmem:[#allocation7 + $0x58] sm:$0xff]
    %v223 = vld [vmem:[#allocation7 + $0x60] sm:$0xff]
    %v224 = vld [vmem:[#allocation7 + $0x68] sm:$0xff]
    %v225 = vld [vmem:[#allocation7 + $0x70] sm:$0xff]
    %v226 = vld [vmem:[#allocation7 + $0x78] sm:$0xff]
    %v227 = vld [vmem:[#allocation7 + $0x80] sm:$0xff]
    %v228 = vld [vmem:[#allocation7 + $0x88] sm:$0xff]
    %v229 = vld [vmem:[#allocation7 + $0x90] sm:$0xff]
    %v230 = vld [vmem:[#allocation7 + $0x98] sm:$0xff]
    %v231 = vld [vmem:[#allocation7 + $0xa0] sm:$0xff]
    %v232 = vld [vmem:[#allocation7 + $0xa8] sm:$0xff]
    %v233 = vld [vmem:[#allocation7 + $0xb0] sm:$0xff]
    %v234 = vld [vmem:[#allocation7 + $0xb8] sm:$0xff]
    %v235 = vld [vmem:[#allocation7 + $0xc0] sm:$0xff]
    %v236 = vld [vmem:[#allocation7 + $0xc8] sm:$0xff]
    %v237 = vld [vmem:[#allocation7 + $0xd0] sm:$0xff]
    %v238 = vld [vmem:[#allocation7 + $0xd8] sm:$0xff]
    %v239 = vld [vmem:[#allocation7 + $0xe0] sm:$0xff]
    %v240 = vld [vmem:[#allocation7 + $0xe8] sm:$0xff]
    %v241 = vld [vmem:[#allocation7 + $0xf0] sm:$0xff]
    %v242 = vld [vmem:[#allocation7 + $0xf8] sm:$0xff]
    %v243 = vld [vmem:[%s4] sm:$0x1]
    %v245 = vlaneseq
    %v246 = vshrl.u32 %v245, 7
    %v247 = vsub.s32 0, %v246
    %v248 = vrot.slane %v243, %v247
    %250 = vmatprep.subr.mxu0 0.0
    %251 = vmatpush1.msra.mxu0 %v211
    %252 = vmatprep.subr.mxu0 0.0
    %253 = vmatpush1.msra.mxu0 %v212
    %254 = vmatprep.subr.mxu0 0.0
    %255 = vmatpush1.msra.mxu0 %v213
    %256 = vmatprep.subr.mxu0 0.0
    %257 = vmatpush1.msra.mxu0 %v214
    %258 = vmatprep.subr.mxu0 0.0
    %259 = vmatpush1.msra.mxu0 %v215
    %260 = vmatprep.subr.mxu0 0.0
    %261 = vmatpush1.msra.mxu0 %v216
    %262 = vmatprep.subr.mxu0 0.0
    %263 = vmatpush1.msra.mxu0 %v217
    %264 = vmatprep.subr.mxu0 0.0
    %265 = vmatpush1.msra.mxu0 %v218
    %266 = vmatprep.subr.mxu0 0.0
    %267 = vmatpush1.msra.mxu0 %v219
    %268 = vmatprep.subr.mxu0 0.0
    %269 = vmatpush1.msra.mxu0 %v220
    %270 = vmatprep.subr.mxu0 0.0
    %271 = vmatpush1.msra.mxu0 %v221
    %272 = vmatprep.subr.mxu0 0.0
    %273 = vmatpush1.msra.mxu0 %v222
    %274 = vmatprep.subr.mxu0 0.0
    %275 = vmatpush1.msra.mxu0 %v223
    %276 = vmatprep.subr.mxu0 0.0
    %277 = vmatpush1.msra.mxu0 %v224
    %278 = vmatprep.subr.mxu0 0.0
    %279 = vmatpush1.msra.mxu0 %v225
    %280 = vmatprep.subr.mxu0 0.0
    %281 = vmatpush1.msra.mxu0 %v226
    %282 = vmatprep.subr.mxu0 0.0
    %283 = vmatpush1.msra.mxu0 %v227
    %284 = vmatprep.subr.mxu0 0.0
    %285 = vmatpush1.msra.mxu0 %v228
    %286 = vmatprep.subr.mxu0 0.0
    %287 = vmatpush1.msra.mxu0 %v229
    %288 = vmatprep.subr.mxu0 0.0
    %289 = vmatpush1.msra.mxu0 %v230
    %290 = vmatprep.subr.mxu0 0.0
    %291 = vmatpush1.msra.mxu0 %v231
    %292 = vmatprep.subr.mxu0 0.0
    %293 = vmatpush1.msra.mxu0 %v232
    %294 = vmatprep.subr.mxu0 0.0
    %295 = vmatpush1.msra.mxu0 %v233
    %296 = vmatprep.subr.mxu0 0.0
    %297 = vmatpush1.msra.mxu0 %v234
    %298 = vmatprep.subr.mxu0 0.0
    %299 = vmatpush1.msra.mxu0 %v235
    %300 = vmatprep.subr.mxu0 0.0
    %301 = vmatpush1.msra.mxu0 %v236
    %302 = vmatprep.subr.mxu0 0.0
    %303 = vmatpush1.msra.mxu0 %v237
    %304 = vmatprep.subr.mxu0 0.0
    %305 = vmatpush1.msra.mxu0 %v238
    %306 = vmatprep.subr.mxu0 0.0
    %307 = vmatpush1.msra.mxu0 %v239
    %308 = vmatprep.subr.mxu0 0.0
    %309 = vmatpush1.msra.mxu0 %v240
    %310 = vmatprep.subr.mxu0 0.0
    %311 = vmatpush1.msra.mxu0 %v241
    %312 = vmatprep.subr.mxu0 0.0
    %313 = vmatpush1.msra.mxu0 %v242
    %314 = vmatprep.mubr.f32.mxu0 %v210
    %315 = vmatmul.mubr.f32.gmra.mrb[0].mxu0 %v209
    %v316 = vpop.f32.mrb[0].mxu0
    %v317 = vadd.f32 %v248, %v316
    %v318 = vpop.f32.mrb[0].mxu0
    %319 = vdwg.mxu0
    %320 = vst [vmem:[#allocation8] sm:$0xff] %v317
    // Predicated region
    $region34: #{tpu_custom_call.1} parent=1 // pred_check
      _
    $region35: #{tpu_custom_call.1} parent=1 // pred_check_branch
      %322 = sbr.rel (0) target = $region37
    $region36: #{tpu_custom_call.1} parent=1 // pred_region
      %s324 = ssub.s32 128, 128
      %325 = vsyncadd [#allocation4], %s324
      %s327 = sshll.u32 [#allocation8], 4
      %s328 = int_to_ptr.vmem [resolvable:$true] %s327
      %330 = dma.vmem_to_hbm [thread:$0]  %s328, 128, %s5, [#allocation4]
    $region37: #{tpu_custom_call.1} parent=1 // pred_fallthru
      _
    // Predicated region
    $region38: #{tpu_custom_call.1} parent=1 // pred_check
      _
    $region39: #{tpu_custom_call.1} parent=1 // pred_check_branch
      %332 = sbr.rel (0) target = $region41
    $region40: #{tpu_custom_call.1} parent=1 // pred_region
      %333 = dma.done [#allocation4], 128
    $region41: #{tpu_custom_call.1} parent=1 // pred_fallthru
      _
    %334 = vsyncpa [#allocation3], 1
    %335 = vsyncpa [#allocation6], 1
    %336 = vsyncpa [#allocation4], 1

</llo_original>
